<compile_context>
chip_gen: v5e
topology: v5e:2x2
jax: 0.10.0
libtpu: 0.0.40
codegen_flags: <defaults>
</compile_context>

<pallas_src>
from types import SimpleNamespace

import jax
import jax.numpy as jnp
from jax.experimental import pallas as pl
from jax.experimental.pallas import tpu as pltpu

WDTYPE = jnp.bfloat16   # matmul operand dtype (weights + im2col columns)


def _round_up(x, m):
    return (x + m - 1) // m * m


_ROLL_SIGN = None


def _roll_sign():
    """pltpu.roll shift-sign convention, probed once per process and cached.

    Returns +1 if pltpu.roll matches jnp.roll (out[i] = x[(i - shift) % N]),
    else -1.  Makes the conv tap shifts robust to either convention.
    """
    global _ROLL_SIGN
    if _ROLL_SIGN is None:
        def k(x_ref, o_ref):
            o_ref[...] = pltpu.roll(x_ref[...], 1, 1)

        x = jnp.broadcast_to(jnp.arange(128, dtype=jnp.float32)[None, :], (8, 128))
        y = pl.pallas_call(k, out_shape=jax.ShapeDtypeStruct((8, 128), jnp.float32))(x)
        _ROLL_SIGN = 1 if float(y[0, 0]) == 127.0 else -1
    return _ROLL_SIGN


# -----------------------------------------------------------------------------
# Parameter construction (PyTorch Conv2d layout) + packing into kernel layout
# -----------------------------------------------------------------------------
def make_conv_params(key, cin, cout):
    """Synthetic Conv2d params: w (cout, cin, 3, 3), b (cout,)."""
    kw, kb = jax.random.split(key)
    scale = 1.0 / jnp.sqrt(jnp.float32(cin * 9))
    w = jax.random.normal(kw, (cout, cin, 3, 3), jnp.float32) * scale
    b = jax.random.normal(kb, (cout,), jnp.float32) * 0.01
    return w, b


def init_params(key, config):
    ndf = config.hidden_feat_ch
    na = config.num_actions
    npar = len(config.parameters_scale)
    shapes = [
        ("conv1", 3, ndf), ("conv2", ndf, ndf), ("conv3", ndf, ndf), ("conv4", ndf, ndf),
        ("conv5_pi", ndf, ndf), ("conv6_pi", ndf, ndf), ("conv7_pi", ndf, na),
        ("conv5_V", ndf, ndf), ("conv6_V", ndf + npar, ndf), ("conv7_V", ndf, 1),
        ("conv5_p", ndf, ndf), ("conv6_p", ndf, ndf), ("conv7_p", ndf, npar),
    ]
    keys = jax.random.split(key, len(shapes))
    return {name: make_conv_params(k, cin, cout)
            for (name, cin, cout), k in zip(shapes, keys)}


def pack_conv_blockdiag(blocks, cin_pads, cout_pads):
    """Pack a block-diagonal group of 3x3 convs into kernel layout.

    blocks[i] = (w, b) with w (cout_i, cin_i, 3, 3).  Block i's real input
    channels occupy rows [sum(cin_pads[:i]) : +cin_i] of the concatenated
    activation; its outputs occupy rows [sum(cout_pads[:i]) : +cout_i].
    Returns W (cout_tot, 9*cin_tot) bf16 and b (cout_tot, 1) f32.  The column
    of tap t (= ky*3+kx), input channel c is t*cin_tot + c.  All padded /
    off-diagonal rows and columns are zero.
    """
    cin_tot = sum(cin_pads)
    cout_tot = sum(cout_pads)
    wk = jnp.zeros((cout_tot, 9, cin_tot), jnp.float32)
    bk = jnp.zeros((cout_tot, 1), jnp.float32)
    r0 = c0 = 0
    for (w, b), cip, cop in zip(blocks, cin_pads, cout_pads):
        cout, cin = w.shape[0], w.shape[1]
        assert cout <= cop and cin <= cip
        wt = jnp.transpose(w, (0, 2, 3, 1)).reshape(cout, 9, cin)   # (cout, tap, cin)
        wk = wk.at[r0:r0 + cout, :, c0:c0 + cin].set(wt)
        bk = bk.at[r0:r0 + cout, 0].set(b)
        r0 += cop
        c0 += cip
    return wk.reshape(cout_tot, 9 * cin_tot).astype(WDTYPE), bk


def pack_conv(w, b, cin_pad, cout_pad):
    return pack_conv_blockdiag([(w, b)], [cin_pad], [cout_pad])


def pack_params(params, config):
    ndf = config.hidden_feat_ch
    na = config.num_actions
    npar = len(config.parameters_scale)
    na_pad = _round_up(na, 8)
    npar_pad = _round_up(npar, 8)
    cin1_pad = 16                                  # x channels 3 -> 16 (bf16 sublane align)
    cin6v_pad = _round_up(ndf + npar_pad, 16)      # 48

    w1, b1 = pack_conv(*params["conv1"], cin_pad=cin1_pad, cout_pad=ndf)
    w2, b2 = pack_conv(*params["conv2"], cin_pad=ndf, cout_pad=ndf)
    w3, b3 = pack_conv(*params["conv3"], cin_pad=ndf, cout_pad=ndf)
    w4, b4 = pack_conv(*params["conv4"], cin_pad=ndf, cout_pad=ndf)

    # conv5_{pi,p,V}: same input h, outputs stacked -> one Cout=3*ndf conv.
    w5pi, b5pi = pack_conv(*params["conv5_pi"], cin_pad=ndf, cout_pad=ndf)
    w5p, b5p = pack_conv(*params["conv5_p"], cin_pad=ndf, cout_pad=ndf)
    w5v, b5v = pack_conv(*params["conv5_V"], cin_pad=ndf, cout_pad=ndf)
    w5 = jnp.concatenate([w5pi, w5p, w5v], axis=0)
    b5 = jnp.concatenate([b5pi, b5p, b5v], axis=0)

    # conv6_pi + conv6_p fused block-diagonally over [h5_pi | h5_p] (dil=2).
    w6f, b6f = pack_conv_blockdiag(
        [params["conv6_pi"], params["conv6_p"]], [ndf, ndf], [ndf, ndf])
    # conv7_pi + conv7_p fused block-diagonally over [h6_pi | h6_p] (dil=1).
    w7f, b7f = pack_conv_blockdiag(
        [params["conv7_pi"], params["conv7_p"]], [ndf, ndf], [na_pad, npar_pad])

    # conv6_V consumes [h5_v (ndf) | p (npar real of npar_pad rows) | zero pad]
    # -> cin_pad = 48; padded p rows get zero weight columns (sigmoid(0)=0.5 is inert).
    w6v, b6v = pack_conv(*params["conv6_V"], cin_pad=cin6v_pad, cout_pad=ndf)
    w7v, b7v = pack_conv(*params["conv7_V"], cin_pad=ndf, cout_pad=8)

    return (w1, b1, w2, b2, w3, b3, w4, b4, w5, b5,
            w6f, b6f, w7f, b7f, w6v, b6v, w7v, b7v)


# -----------------------------------------------------------------------------
# Fused forward pass
# -----------------------------------------------------------------------------
def build_forward(config, H, W):
    ndf = config.hidden_feat_ch
    na = config.num_actions
    npar = len(config.parameters_scale)
    na_pad = _round_up(na, 8)
    npar_pad = _round_up(npar, 8)
    cin1_pad = 16
    cin6v_pad = _round_up(ndf + npar_pad, 16)
    HW = H * W
    KMAX = 9 * max(cin1_pad, ndf, 2 * ndf, cin6v_pad)

    roll_sign = _roll_sign()

    # Flattened-HW rolls wrap across row boundaries; the border masks mark
    # every wrapped tap position invalid.  Guard the geometry assumption so a
    # future H/W/dilation change cannot silently corrupt borders.
    for dil in (1, 2, 3, 4):
        assert 0 < dil < min(H, W), "dilation must be smaller than H and W"

    def kernel(x_ref,
               w1, b1, w2, b2, w3, b3, w4, b4, w5, b5,
               w6f, b6f, w7f, b7f, w6v, b6v, w7v, b7v,
               pi_ref, v_ref, p_ref, col_ref):

        # ---- hoisted index / border-mask computation (shared by all convs) ----
        pos = jax.lax.broadcasted_iota(jnp.int32, (1, HW), 1)
        yy = pos // W
        xx = pos - yy * W
        mask_cache = {}

        def border_mask(dy, dx):
            key = (dy, dx)
            if key not in mask_cache:
                mask_cache[key] = ((yy + dy >= 0) & (yy + dy < H) &
                                   (xx + dx >= 0) & (xx + dx < W))
            return mask_cache[key]

        def conv(act, w_ref, b_ref, cin_pad, dil):
            """Dilated 3x3 'same' conv on (cin_pad, HW) f32 -> (cout, HW) f32.

            im2col: 9 shifted/masked copies of act are stored (as bf16) into
            col_ref, then a single (cout, 9*cin_pad) @ (9*cin_pad, HW) bf16
            MXU matmul with f32 accumulation.
            """
            assert act.shape == (cin_pad, HW)
            for ky in range(3):
                for kx in range(3):
                    t = ky * 3 + kx
                    dy = (ky - 1) * dil
                    dx = (kx - 1) * dil
                    row0 = t * cin_pad
                    if dy == 0 and dx == 0:
                        col_ref[row0:row0 + cin_pad, :] = act.astype(WDTYPE)
                        continue
                    # roll in f32 (robust lowering), mask borders, store bf16.
                    shift = (-roll_sign * (dy * W + dx)) % HW
                    rolled = pltpu.roll(act, shift, 1)
                    col_ref[row0:row0 + cin_pad, :] = jnp.where(
                        border_mask(dy, dx), rolled, 0.0).astype(WDTYPE)
            k = 9 * cin_pad
            acc = jnp.dot(w_ref[...], col_ref[0:k, :],
                          preferred_element_type=jnp.float32)
            return acc + b_ref[...]          # bias (cout, 1) broadcasts on lanes

        relu = lambda z: jnp.maximum(z, 0.0)

        x = x_ref[0]                                          # (cin1_pad, HW)
        h = relu(conv(x, w1, b1, cin1_pad, 1))
        h = relu(conv(h, w2, b2, ndf, 2))
        h = relu(conv(h, w3, b3, ndf, 3))
        h = relu(conv(h, w4, b4, ndf, 4))

        # conv5_pi / conv5_p / conv5_V fused (same input h, dilation 3).
        h5 = relu(conv(h, w5, b5, ndf, 3))                    # (3*ndf, HW)

        # conv6_pi+conv6_p (block-diag, dil=2) then conv7_pi+conv7_p (dil=1).
        h6 = relu(conv(h5[0:2 * ndf, :], w6f, b6f, 2 * ndf, 2))   # (2*ndf, HW)
        out7 = conv(h6, w7f, b7f, 2 * ndf, 1)                     # (na_pad+npar_pad, HW)

        # ---- pi head: softmax over channels (sublanes); padded rows -> 0 ----
        row = jax.lax.broadcasted_iota(jnp.int32, (na_pad, 1), 0)
        logits = jnp.where(row < na, out7[0:na_pad, :], -1e30)
        m = jnp.max(logits, axis=0, keepdims=True)
        e = jnp.exp(logits - m)
        inv = pl.reciprocal(jnp.sum(e, axis=0, keepdims=True), approx=False)
        pi_ref[0] = e * inv                                   # (na_pad, HW)

        # ---- p head: sigmoid + spatial mean (parse_p) ----
        p_pre = out7[na_pad:na_pad + npar_pad, :]             # (npar_pad, HW)
        p_sig = pl.reciprocal(1.0 + jnp.exp(-p_pre), approx=True)
        p_ref[0] = jnp.mean(p_sig, axis=1, keepdims=True)     # (npar_pad, 1)

        # ---- V head: concat in VMEM on aligned sublanes; padded p channels
        #      carry zero conv6_V weight columns so they contribute nothing. --
        h5_v = h5[2 * ndf:3 * ndf, :]
        pad = jnp.zeros((cin6v_pad - ndf - npar_pad, HW), jnp.float32)
        hv_in = jnp.concatenate([h5_v, p_sig, pad], axis=0)   # (cin6v_pad, HW)
        hv = relu(conv(hv_in, w6v, b6v, cin6v_pad, 2))
        v_ref[0] = conv(hv, w7v, b7v, ndf, 1)                 # (8, HW), row 0 real

    @jax.jit
    def forward(x_nchw, packed_params):
        N = x_nchw.shape[0]
        # NCHW -> (N, C, H*W) is a pure reshape (channel-major = kernel layout);
        # pad channels 3 -> 16 once (matching zero weight columns in conv1).
        x_flat = x_nchw.astype(jnp.float32).reshape(N, 3, HW)
        x_packed = jnp.pad(x_flat, ((0, 0), (0, cin1_pad - 3), (0, 0)))

        in_specs = [pl.BlockSpec((1, cin1_pad, HW), lambda n: (n, 0, 0))]
        for arr in packed_params:
            in_specs.append(pl.BlockSpec(arr.shape, lambda n: (0, 0)))

        out_shapes = (
            jax.ShapeDtypeStruct((N, na_pad, HW), jnp.float32),
            jax.ShapeDtypeStruct((N, 8, HW), jnp.float32),
            jax.ShapeDtypeStruct((N, npar_pad, 1), jnp.float32),
        )
        out_specs = (
            pl.BlockSpec((1, na_pad, HW), lambda n: (n, 0, 0)),
            pl.BlockSpec((1, 8, HW), lambda n: (n, 0, 0)),
            pl.BlockSpec((1, npar_pad, 1), lambda n: (n, 0, 0)),
        )

        pi_pad, v_pad, p_pad = pl.pallas_call(
            kernel,
            out_shape=out_shapes,
            grid=(N,),
            in_specs=in_specs,
            out_specs=out_specs,
            scratch_shapes=[pltpu.VMEM((KMAX, HW), WDTYPE)],
            compiler_params=pltpu.CompilerParams(
                dimension_semantics=("parallel",)),
        )(x_packed, *packed_params)

        pi_out = pi_pad[:, :na, :].reshape(N, na, H, W)
        v_out = v_pad[:, :1, :].reshape(N, 1, H, W)
        p_out = p_pad[:, :npar, 0]
        return pi_out, v_out, p_out

    return forward


# -----------------------------------------------------------------------------
if __name__ == "__main__":
    config = SimpleNamespace(
        noise_scale=0.1,
        parameters_scale=[1.0, 1.0, 1.0],  # num_parameters = 3
        hidden_feat_ch=32,                 # ndf
        num_actions=9,
    )

    N, C, H, W = 2, 3, 16, 16
    key = jax.random.PRNGKey(0)
    k_x, k_p = jax.random.split(key)
    x = jax.random.normal(k_x, (N, C, H, W), jnp.float32)

    params = init_params(k_p, config)
    packed = pack_params(params, config)

    forward = build_forward(config, H, W)
    pi_out, v_out, p_out = forward(x, packed)
    jax.block_until_ready((pi_out, v_out, p_out))

    assert pi_out.shape == (N, config.num_actions, H, W)
    assert v_out.shape == (N, 1, H, W)
    assert p_out.shape == (N, len(config.parameters_scale))
    # softmax over channels sums to 1; everything finite
    assert bool(jnp.allclose(jnp.sum(pi_out, axis=1), 1.0, atol=1e-4))
    assert bool(jnp.all(jnp.isfinite(pi_out)))
    assert bool(jnp.all(jnp.isfinite(v_out)))
    assert bool(jnp.all(jnp.isfinite(p_out)))

    print("KERNEL_OK")
</pallas_src>

<mosaic_0001>
module attributes {stable_mosaic.version = 11 : i64} {
  func.func @k(%arg0: memref<8x128xf32, #tpu.memory_space<vmem>>, %arg1: memref<8x128xf32, #tpu.memory_space<vmem>>) attributes {dimension_semantics = [], scalar_prefetch = 0 : i64, scratch_operands = 0 : i64, tpu.core_type = #tpu.core_type<tc>} {
    %c0 = arith.constant 0 : index
    %c0_0 = arith.constant 0 : index
    %0 = vector.load %arg0[%c0, %c0_0] : memref<8x128xf32, #tpu.memory_space<vmem>>, vector<8x128xf32>
    %c1_i32 = arith.constant 1 : i32
    %1 = tpu.dynamic_rotate %0 by %c1_i32 dim 1 : vector<8x128xf32>, i32 -> vector<8x128xf32>
    %c0_1 = arith.constant 0 : index
    %c0_2 = arith.constant 0 : index
    %2 = vector.load %arg1[%c0_1, %c0_2] : memref<8x128xf32, #tpu.memory_space<vmem>>, vector<8x128xf32>
    tpu.vector_store %arg1[%c0_1, %c0_2], %1 {strides = array<i32>} : memref<8x128xf32, #tpu.memory_space<vmem>>, vector<8x128xf32>,
    return
  }
}

</mosaic_0001>

<llo_original>
// kernel: tpu_custom_call.1
$region0: #{tpu_custom_call.1}
  #allocation0 [shape = 'u32[]', space=smem, size = 0x4, offset = 0x4, fixed_abs, tag = 'smem constant byte address 0x4 - core index']
  #allocation1 [shape = 'u32[72,128]{1,0:T(1,128)}', space=vmem, size = 0x9000, scoped, tag = 'internal scratch']
  %s0 = inlined_call_operand.hbm [shape: f32[8,128], index: 0, kind: input, shape index: {}]
  %s1 = inlined_call_operand.hbm [shape: f32[8,128], index: 1, kind: output, shape index: {}]
  %s2 = sld [smem:[#allocation0]]
  $region18: #{tpu_custom_call.1} parent=0
    _
  %s4 = ssub.s32 1, %s2
  %s5 = scalar_select 0, %s4, %s2
  $region1: #{tpu_custom_call.1} parent=0
    #allocation2 [shape = 'u8[4096]{0}', space=vmem, size = 0x1000, scoped, tag = 'input window, operand 0, single buffered']
    #allocation3 [shape = 's32[1]{0}', space=sflag, size = 0x4, scoped, tag = 'scoped memory for tpu_custom_call.1']
    #allocation4 [shape = 's32[1]{0}', space=sflag, size = 0x4, scoped, tag = 'scoped memory for tpu_custom_call.1']
    #allocation5 [shape = 'u8[4096]{0}', space=vmem, size = 0x1000, scoped, tag = 'output window, operand 0, single buffered']
    %6 = vsyncpa [#allocation3], 0
    %7 = vsyncpa [#allocation4], 0
    // Predicated region
    $region2: #{tpu_custom_call.1} parent=1 // pred_check
      _
    $region3: #{tpu_custom_call.1} parent=1 // pred_check_branch
      %9 = sbr.rel (0) target = $region5
    $region4: #{tpu_custom_call.1} parent=1 // pred_region
      %11 = vsyncadd [#allocation3], 0
      %s13 = sshll.u32 %s0, 4
      %s14 = int_to_ptr.hbm [resolvable:$true] %s13
      %s15 = sshll.u32 [#allocation2], 4
      %s16 = int_to_ptr.vmem [resolvable:$true] %s15
      %18 = dma.hbm_to_vmem [thread:$0]  %s14, 128, %s16, [#allocation3]
    $region5: #{tpu_custom_call.1} parent=1 // pred_fallthru
      _
    // Predicated region
    $region6: #{tpu_custom_call.1} parent=1 // pred_check
      _
    $region7: #{tpu_custom_call.1} parent=1 // pred_check_branch
      %20 = sbr.rel (0) target = $region9
    $region8: #{tpu_custom_call.1} parent=1 // pred_region
      %22 = dma.done [#allocation3], 128
    $region9: #{tpu_custom_call.1} parent=1 // pred_fallthru
      _
    %v23 = vld [vmem:[#allocation2] sm:$0xff]
    %24 = vrot.lane.b32.xlu0 %v23, 1
    %v25 = vpop.permute.xlu0 %24
    %26 = vst [vmem:[#allocation5] sm:$0xff] %v25
    // Predicated region
    $region10: #{tpu_custom_call.1} parent=1 // pred_check
      _
    $region11: #{tpu_custom_call.1} parent=1 // pred_check_branch
      %28 = sbr.rel (0) target = $region13
    $region12: #{tpu_custom_call.1} parent=1 // pred_region
      %30 = vsyncadd [#allocation4], 0
      %s32 = sshll.u32 [#allocation5], 4
      %s33 = int_to_ptr.vmem [resolvable:$true] %s32
      %s34 = sshll.u32 %s1, 4
      %s35 = int_to_ptr.hbm [resolvable:$true] %s34
      %37 = dma.vmem_to_hbm [thread:$0]  %s33, 128, %s35, [#allocation4]
    $region13: #{tpu_custom_call.1} parent=1 // pred_fallthru
      _
    // Predicated region
    $region14: #{tpu_custom_call.1} parent=1 // pred_check
      _
    $region15: #{tpu_custom_call.1} parent=1 // pred_check_branch
      %39 = sbr.rel (0) target = $region17
    $region16: #{tpu_custom_call.1} parent=1 // pred_region
      %41 = dma.done [#allocation4], 128
    $region17: #{tpu_custom_call.1} parent=1 // pred_fallthru
      _
    %42 = vsyncpa [#allocation3], 1
    %43 = vsyncpa [#allocation4], 1

</llo_original>
